<compile_context>
chip_gen: v7x
topology: tpu7x:2x2x1
jax: 0.10.0
libtpu: 0.0.40
codegen_flags: <defaults>
</compile_context>

<pallas_src>
import functools

import jax
import jax.numpy as jnp
from jax import lax
from jax.experimental import pallas as pl
from jax.experimental.pallas import tpu as pltpu

LANE = 128
SUBLANE = 8


def _round_up(n, m):
    return ((n + m - 1) // m) * m


def _pick_tile_b(b8, max_tile):
    """Pick a batch tile that divides b8 (a multiple of 8): no wasted rows."""
    max_tile = max(SUBLANE, _round_up(max_tile, SUBLANE))
    if b8 <= max_tile:
        # Big-enough single-tile batches: split in two so a v7x megacore grid
        # has >=2 steps (harmless on v5e/v6e).
        if b8 >= 256 and b8 % (2 * SUBLANE) == 0:
            return b8 // 2
        return b8
    for t in range(max_tile, SUBLANE - 1, -SUBLANE):
        if b8 % t == 0:
            return t
    return SUBLANE


def _mlp_kernel(x_ref, w1_ref, b1_ref, w2_ref, b2_ref, w3_ref, b3_ref,
                *out_refs, n_actions, emit_q, emit_a):
    # MXU matmuls in bf16, accumulate f32; bias/ReLU/argmax stay f32 (VPU).
    x = x_ref[...].astype(jnp.bfloat16)
    h1 = jnp.dot(x, w1_ref[...], preferred_element_type=jnp.float32) + b1_ref[...]
    h1 = jnp.maximum(h1, 0.0)
    h2 = jnp.dot(h1.astype(jnp.bfloat16), w2_ref[...],
                 preferred_element_type=jnp.float32) + b2_ref[...]
    h2 = jnp.maximum(h2, 0.0)
    q = jnp.dot(h2.astype(jnp.bfloat16), w3_ref[...],
                preferred_element_type=jnp.float32) + b3_ref[...]

    idx = 0
    if emit_q:
        out_refs[idx][...] = q.astype(out_refs[idx].dtype)
        idx += 1
    if emit_a:
        # Fused argmax over real action columns (padded cols masked to -inf),
        # first-max tie-breaking to match torch.argmax / jnp.argmax.
        col = lax.broadcasted_iota(jnp.int32, q.shape, 1)
        valid = col < n_actions
        qm = jnp.where(valid, q, -jnp.inf)
        row_max = jnp.max(qm, axis=-1, keepdims=True)
        cand = jnp.where(jnp.logical_and(valid, qm == row_max), col, q.shape[-1])
        out_refs[idx][...] = jnp.min(cand, axis=-1, keepdims=True).astype(jnp.int32)


def _net_pallas(x, prepared, *, n_actions, max_tile_b, emit_q, emit_a):
    x = x.astype(jnp.float32)
    B, state_dim = x.shape
    size = prepared["w2"].shape[0]
    a_pad = prepared["w3"].shape[1]

    b8 = _round_up(B, SUBLANE)
    tile_b = _pick_tile_b(b8, max_tile_b)
    b_pad = _round_up(b8, tile_b)            # == b8 since tile_b divides b8

    if b_pad != B:
        x_p = jnp.zeros((b_pad, state_dim), jnp.float32).at[:B].set(x)
    else:
        x_p = x

    resident = lambda shape: pl.BlockSpec(shape, lambda i: (0, 0))  # weights stay in VMEM

    out_shapes, out_specs = [], []
    if emit_q:
        out_shapes.append(jax.ShapeDtypeStruct((b_pad, a_pad), jnp.float32))
        out_specs.append(pl.BlockSpec((tile_b, a_pad), lambda i: (i, 0)))
    if emit_a:
        out_shapes.append(jax.ShapeDtypeStruct((b_pad, 1), jnp.int32))
        out_specs.append(pl.BlockSpec((tile_b, 1), lambda i: (i, 0)))

    flops = 2 * b_pad * (state_dim * size + size * size + size * a_pad)
    bytes_accessed = (
        4 * x_p.size
        + 2 * (prepared["w1"].size + prepared["w2"].size + prepared["w3"].size)
        + 4 * (prepared["b1"].size + prepared["b2"].size + prepared["b3"].size)
        + (4 * b_pad * a_pad if emit_q else 0)
        + (4 * b_pad if emit_a else 0))

    outs = pl.pallas_call(
        functools.partial(_mlp_kernel, n_actions=n_actions,
                          emit_q=emit_q, emit_a=emit_a),
        out_shape=tuple(out_shapes),
        grid=(b_pad // tile_b,),
        in_specs=[
            pl.BlockSpec((tile_b, state_dim), lambda i: (i, 0)),  # x: tiled over batch
            resident((state_dim, size)), resident((1, size)),     # w1, b1
            resident((size, size)), resident((1, size)),          # w2, b2
            resident((size, a_pad)), resident((1, a_pad)),        # w3, b3
        ],
        out_specs=tuple(out_specs),
        compiler_params=pltpu.CompilerParams(
            dimension_semantics=("parallel",)),
        cost_estimate=pl.CostEstimate(flops=flops, transcendentals=0,
                                      bytes_accessed=bytes_accessed),
    )(x_p, prepared["w1"], prepared["b1"], prepared["w2"], prepared["b2"],
      prepared["w3"], prepared["b3"])

    q = outs[0][:B, :n_actions] if emit_q else None
    a = outs[-1][:B, 0] if emit_a else None
    return q, a


@functools.partial(jax.jit, static_argnames=("n_actions", "max_tile_b"))
def net_forward(x, prepared, *, n_actions, max_tile_b=512):
    """Net.forward: Q-values of shape (B, n_actions), f32."""
    q, _ = _net_pallas(x, prepared, n_actions=n_actions, max_tile_b=max_tile_b,
                       emit_q=True, emit_a=False)
    return q


@functools.partial(jax.jit, static_argnames=("n_actions", "max_tile_b"))
def get_action(x, prepared, *, n_actions, max_tile_b=512):
    """Net.get_action: argmax of Q-values, fused in-kernel; no q writeback."""
    _, a = _net_pallas(x, prepared, n_actions=n_actions, max_tile_b=max_tile_b,
                       emit_q=False, emit_a=True)
    return a


@functools.partial(jax.jit, static_argnames=("n_actions", "max_tile_b"))
def net_forward_and_action(x, prepared, *, n_actions, max_tile_b=512):
    """Single launch returning (q, action)."""
    return _net_pallas(x, prepared, n_actions=n_actions, max_tile_b=max_tile_b,
                       emit_q=True, emit_a=True)


def init_params(key, state_dim, n_actions, size=256):
    """Weights ~ U(-0.001, 0.001) (as in the module); biases use PyTorch's
    default Linear init U(-1/sqrt(fan_in), 1/sqrt(fan_in)).
    Weights stored pre-transposed as (in_features, out_features), f32."""
    ks = jax.random.split(key, 6)
    u = lambda k, shape, lo, hi: jax.random.uniform(
        k, shape, dtype=jnp.float32, minval=lo, maxval=hi)
    bias_bound = lambda fan_in: 1.0 / jnp.sqrt(jnp.float32(fan_in))
    w1 = u(ks[0], (state_dim, size), -0.001, 0.001)
    b1 = u(ks[1], (1, size), -bias_bound(state_dim), bias_bound(state_dim))
    w2 = u(ks[2], (size, size), -0.001, 0.001)
    b2 = u(ks[3], (1, size), -bias_bound(size), bias_bound(size))
    w3 = u(ks[4], (size, n_actions), -0.001, 0.001)
    b3 = u(ks[5], (1, n_actions), -bias_bound(size), bias_bound(size))
    return dict(w1=w1, b1=b1, w2=w2, b2=b2, w3=w3, b3=b3)


def prepare_params(params):
    """One-time prep: cast matmul weights to bf16 and lane-pad W3/b3 so the
    q output slab is lane-dense. Padded columns are zero (masked in argmax)."""
    size, n_actions = params["w3"].shape
    a_pad = _round_up(n_actions, LANE)
    w3_p = (jnp.zeros((size, a_pad), jnp.float32)
            .at[:, :n_actions].set(params["w3"])).astype(jnp.bfloat16)
    b3_p = jnp.zeros((1, a_pad), jnp.float32).at[:, :n_actions].set(params["b3"])
    return dict(
        w1=params["w1"].astype(jnp.bfloat16),
        b1=params["b1"].astype(jnp.float32),
        w2=params["w2"].astype(jnp.bfloat16),
        b2=params["b2"].astype(jnp.float32),
        w3=w3_p,
        b3=b3_p,
    )


if __name__ == "__main__":
    key = jax.random.PRNGKey(0)
    k_param, k_x = jax.random.split(key)

    batch, state_dim, n_actions, size = 2, 4, 3, 256
    params = init_params(k_param, state_dim, n_actions, size)
    prepared = prepare_params(params)
    x = jax.random.normal(k_x, (batch, state_dim), dtype=jnp.float32)

    q = jax.block_until_ready(net_forward(x, prepared, n_actions=n_actions))
    a = jax.block_until_ready(get_action(x, prepared, n_actions=n_actions))
    q2, a2 = jax.block_until_ready(
        net_forward_and_action(x, prepared, n_actions=n_actions))

    assert q.shape == (batch, n_actions)
    assert a.shape == (batch,)
    assert a.dtype == jnp.int32
    assert q2.shape == (batch, n_actions) and a2.shape == (batch,)

    # reference check in plain JAX (f32); tolerance loosened for bf16 matmuls
    h1 = jnp.maximum(x @ params["w1"] + params["b1"], 0.0)
    h2 = jnp.maximum(h1 @ params["w2"] + params["b2"], 0.0)
    q_ref = h2 @ params["w3"] + params["b3"]
    assert jnp.allclose(q, q_ref, atol=2e-3, rtol=2e-2)
    assert jnp.allclose(q2, q, atol=0, rtol=0)
    # fused argmax must agree with argmax over the kernel's own q-values
    assert jnp.array_equal(a, jnp.argmax(q, axis=-1))
    assert jnp.array_equal(a2, a)
    assert jnp.array_equal(a, jnp.argmax(q_ref, axis=-1))

    print("KERNEL_OK")
</pallas_src>

<mosaic_0001>
module attributes {stable_mosaic.version = 11 : i64} {
  func.func @_mlp_kernel(%arg0: i32, %arg1: memref<8x4xf32, #tpu.memory_space<vmem>>, %arg2: memref<4x256xbf16, #tpu.memory_space<vmem>>, %arg3: memref<1x256xf32, #tpu.memory_space<vmem>>, %arg4: memref<256x256xbf16, #tpu.memory_space<vmem>>, %arg5: memref<1x256xf32, #tpu.memory_space<vmem>>, %arg6: memref<256x128xbf16, #tpu.memory_space<vmem>>, %arg7: memref<1x128xf32, #tpu.memory_space<vmem>>, %arg8: memref<8x128xf32, #tpu.memory_space<vmem>>) attributes {dimension_semantics = [#tpu.dimension_semantics<parallel>], iteration_bounds = array<i64: 1>, scalar_prefetch = 0 : i64, scratch_operands = 0 : i64, tpu.core_type = #tpu.core_type<tc>, window_params = [{transform_indices = @transform_0, window_bounds = array<i64: 8, 4>}, {pipeline_mode = #tpu.pipeline_mode<synchronous>, transform_indices = @transform_1, window_bounds = array<i64: 4, 256>}, {pipeline_mode = #tpu.pipeline_mode<synchronous>, transform_indices = @transform_2, window_bounds = array<i64: 1, 256>}, {pipeline_mode = #tpu.pipeline_mode<synchronous>, transform_indices = @transform_3, window_bounds = array<i64: 256, 256>}, {pipeline_mode = #tpu.pipeline_mode<synchronous>, transform_indices = @transform_4, window_bounds = array<i64: 1, 256>}, {pipeline_mode = #tpu.pipeline_mode<synchronous>, transform_indices = @transform_5, window_bounds = array<i64: 256, 128>}, {pipeline_mode = #tpu.pipeline_mode<synchronous>, transform_indices = @transform_6, window_bounds = array<i64: 1, 128>}, {transform_indices = @transform_7, window_bounds = array<i64: 8, 128>}]} {
    %c0 = arith.constant 0 : index
    %c0_0 = arith.constant 0 : index
    %0 = vector.load %arg1[%c0, %c0_0] : memref<8x4xf32, #tpu.memory_space<vmem>>, vector<8x4xf32>
    %1 = arith.truncf %0 : vector<8x4xf32> to vector<8x4xbf16>
    %c0_1 = arith.constant 0 : index
    %c0_2 = arith.constant 0 : index
    %2 = vector.load %arg2[%c0_1, %c0_2] : memref<4x256xbf16, #tpu.memory_space<vmem>>, vector<4x256xbf16>
    %cst = arith.constant dense<0.000000e+00> : vector<8x256xf32>
    %3 = tpu.matmul %1, %2, %cst {dimension_numbers = #tpu.dot_dimension_numbers<[1], [0], [0], [1], [0, 0, 1, 1], [], []>} : vector<8x4xbf16>, vector<4x256xbf16>, vector<8x256xf32> -> vector<8x256xf32>
    %c0_3 = arith.constant 0 : index
    %c0_4 = arith.constant 0 : index
    %4 = vector.load %arg3[%c0_3, %c0_4] : memref<1x256xf32, #tpu.memory_space<vmem>>, vector<1x256xf32>
    %5 = vector.broadcast %4 : vector<1x256xf32> to vector<8x256xf32>
    %6 = arith.addf %3, %5 : vector<8x256xf32>
    %cst_5 = arith.constant 0.000000e+00 : f32
    %7 = vector.broadcast %cst_5 : f32 to vector<8x256xf32>
    %8 = arith.maximumf %6, %7 : vector<8x256xf32>
    %9 = arith.truncf %8 : vector<8x256xf32> to vector<8x256xbf16>
    %c0_6 = arith.constant 0 : index
    %c0_7 = arith.constant 0 : index
    %10 = vector.load %arg4[%c0_6, %c0_7] : memref<256x256xbf16, #tpu.memory_space<vmem>>, vector<256x256xbf16>
    %cst_8 = arith.constant dense<0.000000e+00> : vector<8x256xf32>
    %11 = tpu.matmul %9, %10, %cst_8 {dimension_numbers = #tpu.dot_dimension_numbers<[1], [0], [0], [1], [0, 0, 1, 1], [], []>} : vector<8x256xbf16>, vector<256x256xbf16>, vector<8x256xf32> -> vector<8x256xf32>
    %c0_9 = arith.constant 0 : index
    %c0_10 = arith.constant 0 : index
    %12 = vector.load %arg5[%c0_9, %c0_10] : memref<1x256xf32, #tpu.memory_space<vmem>>, vector<1x256xf32>
    %13 = vector.broadcast %12 : vector<1x256xf32> to vector<8x256xf32>
    %14 = arith.addf %11, %13 : vector<8x256xf32>
    %cst_11 = arith.constant 0.000000e+00 : f32
    %15 = vector.broadcast %cst_11 : f32 to vector<8x256xf32>
    %16 = arith.maximumf %14, %15 : vector<8x256xf32>
    %17 = arith.truncf %16 : vector<8x256xf32> to vector<8x256xbf16>
    %c0_12 = arith.constant 0 : index
    %c0_13 = arith.constant 0 : index
    %18 = vector.load %arg6[%c0_12, %c0_13] : memref<256x128xbf16, #tpu.memory_space<vmem>>, vector<256x128xbf16>
    %cst_14 = arith.constant dense<0.000000e+00> : vector<8x128xf32>
    %19 = tpu.matmul %17, %18, %cst_14 {dimension_numbers = #tpu.dot_dimension_numbers<[1], [0], [0], [1], [0, 0, 1, 1], [], []>} : vector<8x256xbf16>, vector<256x128xbf16>, vector<8x128xf32> -> vector<8x128xf32>
    %c0_15 = arith.constant 0 : index
    %c0_16 = arith.constant 0 : index
    %20 = vector.load %arg7[%c0_15, %c0_16] : memref<1x128xf32, #tpu.memory_space<vmem>>, vector<1x128xf32>
    %21 = vector.broadcast %20 : vector<1x128xf32> to vector<8x128xf32>
    %22 = arith.addf %19, %21 : vector<8x128xf32>
    %c0_17 = arith.constant 0 : index
    %c0_18 = arith.constant 0 : index
    %23 = vector.load %arg8[%c0_17, %c0_18] : memref<8x128xf32, #tpu.memory_space<vmem>>, vector<8x128xf32>
    tpu.vector_store %arg8[%c0_17, %c0_18], %22 {strides = array<i32>} : memref<8x128xf32, #tpu.memory_space<vmem>>, vector<8x128xf32>,
    return
  }
  func.func @transform_0(%arg0: i32) -> (i32, i32) {
    %c0_i32 = arith.constant 0 : i32
    %c0_i32_0 = arith.constant 0 : i32
    return %arg0, %c0_i32 : i32, i32
  }
  func.func @transform_1(%arg0: i32) -> (i32, i32) {
    %c0_i32 = arith.constant 0 : i32
    %c0_i32_0 = arith.constant 0 : i32
    %c0_i32_1 = arith.constant 0 : i32
    return %c0_i32, %c0_i32_0 : i32, i32
  }
  func.func @transform_2(%arg0: i32) -> (i32, i32) {
    %c0_i32 = arith.constant 0 : i32
    %c0_i32_0 = arith.constant 0 : i32
    %c0_i32_1 = arith.constant 0 : i32
    return %c0_i32, %c0_i32_0 : i32, i32
  }
  func.func @transform_3(%arg0: i32) -> (i32, i32) {
    %c0_i32 = arith.constant 0 : i32
    %c0_i32_0 = arith.constant 0 : i32
    %c0_i32_1 = arith.constant 0 : i32
    return %c0_i32, %c0_i32_0 : i32, i32
  }
  func.func @transform_4(%arg0: i32) -> (i32, i32) {
    %c0_i32 = arith.constant 0 : i32
    %c0_i32_0 = arith.constant 0 : i32
    %c0_i32_1 = arith.constant 0 : i32
    return %c0_i32, %c0_i32_0 : i32, i32
  }
  func.func @transform_5(%arg0: i32) -> (i32, i32) {
    %c0_i32 = arith.constant 0 : i32
    %c0_i32_0 = arith.constant 0 : i32
    %c0_i32_1 = arith.constant 0 : i32
    return %c0_i32, %c0_i32_0 : i32, i32
  }
  func.func @transform_6(%arg0: i32) -> (i32, i32) {
    %c0_i32 = arith.constant 0 : i32
    %c0_i32_0 = arith.constant 0 : i32
    %c0_i32_1 = arith.constant 0 : i32
    return %c0_i32, %c0_i32_0 : i32, i32
  }
  func.func @transform_7(%arg0: i32) -> (i32, i32) {
    %c0_i32 = arith.constant 0 : i32
    %c0_i32_0 = arith.constant 0 : i32
    return %arg0, %c0_i32 : i32, i32
  }
}

</mosaic_0001>

<llo_original>
// kernel: net_forward.1
$region0: #{net_forward.1}
  #allocation0 [shape = 'u32[]', space=smem, size = 0x4, offset = 0x4, fixed_abs, tag = 'smem constant byte address 0x4 - core index']
  #allocation1 [shape = 'u32[144,128]{1,0:T(1,128)}', space=vmem, size = 0x12000, scoped, tag = 'internal scratch']
  %s0 = inlined_call_operand.vmem [shape: f32[8,4], index: 0, kind: input, shape index: {}]
  %s1 = inlined_call_operand.vmem [shape: bf16[4,256], index: 1, kind: input, shape index: {}]
  %s2 = inlined_call_operand.vmem [shape: f32[1,256], index: 2, kind: input, shape index: {}]
  %s3 = inlined_call_operand.hbm [shape: bf16[256,256], index: 3, kind: input, shape index: {}]
  %s4 = inlined_call_operand.vmem [shape: f32[1,256], index: 4, kind: input, shape index: {}]
  %s5 = inlined_call_operand.hbm [shape: bf16[256,128], index: 5, kind: input, shape index: {}]
  %s6 = inlined_call_operand.vmem [shape: f32[1,128], index: 6, kind: input, shape index: {}]
  %s7 = inlined_call_operand.vmem [shape: f32[8,128], index: 7, kind: output, shape index: {}]
  %s8 = sld [smem:[#allocation0]]
  $region46: #{net_forward.1} parent=0
    _
  %s10 = ssub.s32 1, %s8
  %s11 = scalar_select 0, %s10, %s8
  $region1: #{net_forward.1} parent=0
    #allocation2 [shape = 'u8[131072]{0}', space=vmem, size = 0x20000, scoped, tag = 'input window, operand 3, single buffered']
    #allocation3 [shape = 's32[1]{0}', space=sflag, size = 0x4, scoped, tag = 'scoped memory for net_forward.1']
    #allocation4 [shape = 'u8[65536]{0}', space=vmem, size = 0x10000, scoped, tag = 'input window, operand 5, single buffered']
    #allocation5 [shape = 's32[1]{0}', space=sflag, size = 0x4, scoped, tag = 'scoped memory for net_forward.1']
    %12 = vsyncpa [#allocation3], 0
    %13 = vsyncpa [#allocation5], 0
    // Predicated region
    $region2: #{net_forward.1} parent=1 // pred_check
      _
    $region3: #{net_forward.1} parent=1 // pred_check_branch
      %15 = sbr.rel (0) target = $region5
    $region4: #{net_forward.1} parent=1 // pred_region
      _
    $region5: #{net_forward.1} parent=1 // pred_fallthru
      _
    // Predicated region
    $region6: #{net_forward.1} parent=1 // pred_check
      _
    $region7: #{net_forward.1} parent=1 // pred_check_branch
      %17 = sbr.rel (0) target = $region9
    $region8: #{net_forward.1} parent=1 // pred_region
      _
    $region9: #{net_forward.1} parent=1 // pred_fallthru
      _
    // Predicated region
    $region10: #{net_forward.1} parent=1 // pred_check
      _
    $region11: #{net_forward.1} parent=1 // pred_check_branch
      %19 = sbr.rel (0) target = $region13
    $region12: #{net_forward.1} parent=1 // pred_region
      _
    $region13: #{net_forward.1} parent=1 // pred_fallthru
      _
    // Predicated region
    $region14: #{net_forward.1} parent=1 // pred_check
      _
    $region15: #{net_forward.1} parent=1 // pred_check_branch
      %21 = sbr.rel (0) target = $region17
    $region16: #{net_forward.1} parent=1 // pred_region
      %s23 = ssub.s32 4096, 4096
      %24 = vsyncadd [#allocation3], %s23
      %s25 = sshll.u32 [#allocation2], 4
      %s26 = int_to_ptr.vmem [resolvable:$true] %s25
      %31 = dma.hbm_to_vmem [thread:$0]  %s3, 4096, %s26, [#allocation3], 128, 128, 8
    $region17: #{net_forward.1} parent=1 // pred_fallthru
      _
    // Predicated region
    $region18: #{net_forward.1} parent=1 // pred_check
      _
    $region19: #{net_forward.1} parent=1 // pred_check_branch
      %33 = sbr.rel (0) target = $region21
    $region20: #{net_forward.1} parent=1 // pred_region
      _
    $region21: #{net_forward.1} parent=1 // pred_fallthru
      _
    // Predicated region
    $region22: #{net_forward.1} parent=1 // pred_check
      _
    $region23: #{net_forward.1} parent=1 // pred_check_branch
      %35 = sbr.rel (0) target = $region25
    $region24: #{net_forward.1} parent=1 // pred_region
      %s37 = ssub.s32 2048, 2048
      %38 = vsyncadd [#allocation5], %s37
      %s39 = sshll.u32 [#allocation4], 4
      %s40 = int_to_ptr.vmem [resolvable:$true] %s39
      %45 = dma.hbm_to_vmem [thread:$0]  %s5, 2048, %s40, [#allocation5], 64, 64, 4
    $region25: #{net_forward.1} parent=1 // pred_fallthru
      _
    // Predicated region
    $region26: #{net_forward.1} parent=1 // pred_check
      _
    $region27: #{net_forward.1} parent=1 // pred_check_branch
      %47 = sbr.rel (0) target = $region29
    $region28: #{net_forward.1} parent=1 // pred_region
      _
    $region29: #{net_forward.1} parent=1 // pred_fallthru
      _
    // Predicated region
    $region30: #{net_forward.1} parent=1 // pred_check
      _
    $region31: #{net_forward.1} parent=1 // pred_check_branch
      %49 = sbr.rel (0) target = $region33
    $region32: #{net_forward.1} parent=1 // pred_region
      %50 = dma.done [#allocation3], 4096
    $region33: #{net_forward.1} parent=1 // pred_fallthru
      _
    // Predicated region
    $region34: #{net_forward.1} parent=1 // pred_check
      _
    $region35: #{net_forward.1} parent=1 // pred_check_branch
      %52 = sbr.rel (0) target = $region37
    $region36: #{net_forward.1} parent=1 // pred_region
      %53 = dma.done [#allocation5], 2048
    $region37: #{net_forward.1} parent=1 // pred_fallthru
      _
    %v55 = vld [vmem:[%s0] sm:$0xff]
    %v56 = vpack.c.bf16 %v55, %v55
    %v57 = vld [vmem:[%s1] sm:$0xf]
    %v58 = vld [vmem:[%s2] sm:$0x3]
    %v60 = vlaneseq
    %v61 = vshrl.u32 %v60, 7
    %v62 = vsub.s32 0, %v61
    %v63 = vrot.slane %v58, %v62
    %v64 = vlaneseq
    %v65 = vshrl.u32 %v64, 7
    %v66 = vsub.s32 1, %v65
    %v67 = vrot.slane %v58, %v66
    %v72 = vunpack.c.l.s4 1983009808
    %v73 = vunpack.c.0.s8 %v72
    %v74 = vlaneseq
    %v75 = vshrl.u32 %v74, 7
    %v76 = vsub.s32 %v73, %v75
    %v77 = vrot.slane %v57, %v76
    %v78 = vcombine.high %v77, %v77
    %vm79 = vcmask 31744
    %v81 = vsel %vm79, %v56, 0
    %vm83 = vcmask 1041408
    %v85 = vsel %vm83, %v77, 0
    %v88 = vsel %vm83, %v78, 0
    %90 = vmatprep.subr.bf16.mxu0 %v88
    %91 = vmatpush1.bf16.msra.mxu0 %v85
    %92 = vmatprep.subr.bf16.mxu0 0
    %93 = vmatpush1.bf16.msra.mxu0 0
    %94 = vmatprep.subr.bf16.mxu0 0
    %95 = vmatpush1.bf16.msra.mxu0 0
    %96 = vmatprep.subr.bf16.mxu0 0
    %97 = vmatpush1.bf16.msra.mxu0 0
    %98 = vmatprep.subr.bf16.mxu0 0
    %99 = vmatpush1.bf16.msra.mxu0 0
    %100 = vmatprep.subr.bf16.mxu0 0
    %101 = vmatpush1.bf16.msra.mxu0 0
    %102 = vmatprep.subr.bf16.mxu0 0
    %103 = vmatpush1.bf16.msra.mxu0 0
    %104 = vmatprep.subr.bf16.mxu0 0
    %105 = vmatpush1.bf16.msra.mxu0 0
    %106 = vmatprep.subr.bf16.mxu0 0
    %107 = vmatpush1.bf16.msra.mxu0 0
    %108 = vmatprep.subr.bf16.mxu0 0
    %109 = vmatpush1.bf16.msra.mxu0 0
    %110 = vmatprep.subr.bf16.mxu0 0
    %111 = vmatpush1.bf16.msra.mxu0 0
    %112 = vmatprep.subr.bf16.mxu0 0
    %113 = vmatpush1.bf16.msra.mxu0 0
    %114 = vmatprep.subr.bf16.mxu0 0
    %115 = vmatpush1.bf16.msra.mxu0 0
    %116 = vmatprep.subr.bf16.mxu0 0
    %117 = vmatpush1.bf16.msra.mxu0 0
    %118 = vmatprep.subr.bf16.mxu0 0
    %119 = vmatpush1.bf16.msra.mxu0 0
    %120 = vmatprep.subr.bf16.mxu0 0
    %121 = vmatpush1.bf16.msra.mxu0 0
    %122 = vmatprep.mubr.bf16.mxu0 0
    %123 = vmatmul.mubr.bf16.gmra.mrb[0].mxu0 %v81
    %v124 = vpop.f32.mrb[0].mxu0
    %v125 = vadd.f32 %v63, %v124
    %v126 = vpop.f32.mrb[0].mxu0
    %v127 = vadd.f32 %v67, %v126
    %v128 = vpop.f32.mrb[0].mxu0
    %v129 = vpop.f32.mrb[0].mxu0
    %130 = vdwg.mxu0
    %v131 = vmax.f32 %v125, 0.0
    %v132 = vmax.f32 %v127, 0.0
    %v133 = vpack.c.bf16 %v131, %v131
    %v134 = vpack.c.bf16 %v132, %v132
    %v135 = vld [vmem:[#allocation2] sm:$0xff]
    %v136 = vld [vmem:[#allocation2 + $0x8] sm:$0xff]
    %v137 = vld [vmem:[#allocation2 + $0x10] sm:$0xff]
    %v138 = vld [vmem:[#allocation2 + $0x18] sm:$0xff]
    %v139 = vld [vmem:[#allocation2 + $0x20] sm:$0xff]
    %v140 = vld [vmem:[#allocation2 + $0x28] sm:$0xff]
    %v141 = vld [vmem:[#allocation2 + $0x30] sm:$0xff]
    %v142 = vld [vmem:[#allocation2 + $0x38] sm:$0xff]
    %v143 = vld [vmem:[#allocation2 + $0x40] sm:$0xff]
    %v144 = vld [vmem:[#allocation2 + $0x48] sm:$0xff]
    %v145 = vld [vmem:[#allocation2 + $0x50] sm:$0xff]
    %v146 = vld [vmem:[#allocation2 + $0x58] sm:$0xff]
    %v147 = vld [vmem:[#allocation2 + $0x60] sm:$0xff]
    %v148 = vld [vmem:[#allocation2 + $0x68] sm:$0xff]
    %v149 = vld [vmem:[#allocation2 + $0x70] sm:$0xff]
    %v150 = vld [vmem:[#allocation2 + $0x78] sm:$0xff]
    %v151 = vld [vmem:[#allocation2 + $0x80] sm:$0xff]
    %v152 = vld [vmem:[#allocation2 + $0x88] sm:$0xff]
    %v153 = vld [vmem:[#allocation2 + $0x90] sm:$0xff]
    %v154 = vld [vmem:[#allocation2 + $0x98] sm:$0xff]
    %v155 = vld [vmem:[#allocation2 + $0xa0] sm:$0xff]
    %v156 = vld [vmem:[#allocation2 + $0xa8] sm:$0xff]
    %v157 = vld [vmem:[#allocation2 + $0xb0] sm:$0xff]
    %v158 = vld [vmem:[#allocation2 + $0xb8] sm:$0xff]
    %v159 = vld [vmem:[#allocation2 + $0xc0] sm:$0xff]
    %v160 = vld [vmem:[#allocation2 + $0xc8] sm:$0xff]
    %v161 = vld [vmem:[#allocation2 + $0xd0] sm:$0xff]
    %v162 = vld [vmem:[#allocation2 + $0xd8] sm:$0xff]
    %v163 = vld [vmem:[#allocation2 + $0xe0] sm:$0xff]
    %v164 = vld [vmem:[#allocation2 + $0xe8] sm:$0xff]
    %v165 = vld [vmem:[#allocation2 + $0xf0] sm:$0xff]
    %v166 = vld [vmem:[#allocation2 + $0xf8] sm:$0xff]
    %v167 = vld [vmem:[%s4] sm:$0x3]
    %v169 = vlaneseq
    %v170 = vshrl.u32 %v169, 7
    %v171 = vsub.s32 0, %v170
    %v172 = vrot.slane %v167, %v171
    %v173 = vlaneseq
    %v174 = vshrl.u32 %v173, 7
    %v175 = vsub.s32 1, %v174
    %v176 = vrot.slane %v167, %v175
    %v211 = vunpack.c.l.b16 %v135
    %v212 = vunpack.c.h.b16 %v135
    %v213 = vunpack.c.l.b16 %v136
    %v214 = vunpack.c.h.b16 %v136
    %v215 = vunpack.c.l.b16 %v137
    %v216 = vunpack.c.h.b16 %v137
    %v217 = vunpack.c.l.b16 %v138
    %v218 = vunpack.c.h.b16 %v138
    %v219 = vunpack.c.l.b16 %v139
    %v220 = vunpack.c.h.b16 %v139
    %v221 = vunpack.c.l.b16 %v140
    %v222 = vunpack.c.h.b16 %v140
    %v223 = vunpack.c.l.b16 %v141
    %v224 = vunpack.c.h.b16 %v141
    %v225 = vunpack.c.l.b16 %v142
    %v226 = vunpack.c.h.b16 %v142
    %v227 = vunpack.c.l.b16 %v143
    %v228 = vunpack.c.h.b16 %v143
    %v229 = vunpack.c.l.b16 %v144
    %v230 = vunpack.c.h.b16 %v144
    %v231 = vunpack.c.l.b16 %v145
    %v232 = vunpack.c.h.b16 %v145
    %v233 = vunpack.c.l.b16 %v146
    %v234 = vunpack.c.h.b16 %v146
    %v235 = vunpack.c.l.b16 %v147
    %v236 = vunpack.c.h.b16 %v147
    %v237 = vunpack.c.l.b16 %v148
    %v238 = vunpack.c.h.b16 %v148
    %v239 = vunpack.c.l.b16 %v149
    %v240 = vunpack.c.h.b16 %v149
    %v241 = vunpack.c.l.b16 %v150
    %v242 = vunpack.c.h.b16 %v150
    %v243 = vunpack.c.l.b16 %v151
    %v244 = vunpack.c.h.b16 %v151
    %v245 = vunpack.c.l.b16 %v152
    %v246 = vunpack.c.h.b16 %v152
    %v247 = vunpack.c.l.b16 %v153
    %v248 = vunpack.c.h.b16 %v153
    %v249 = vunpack.c.l.b16 %v154
    %v250 = vunpack.c.h.b16 %v154
    %v251 = vunpack.c.l.b16 %v155
    %v252 = vunpack.c.h.b16 %v155
    %v253 = vunpack.c.l.b16 %v156
    %v254 = vunpack.c.h.b16 %v156
    %v255 = vunpack.c.l.b16 %v157
    %v256 = vunpack.c.h.b16 %v157
    %v257 = vunpack.c.l.b16 %v158
    %v258 = vunpack.c.h.b16 %v158
    %v259 = vunpack.c.l.b16 %v159
    %v260 = vunpack.c.h.b16 %v159
    %v261 = vunpack.c.l.b16 %v160
    %v262 = vunpack.c.h.b16 %v160
    %v263 = vunpack.c.l.b16 %v161
    %v264 = vunpack.c.h.b16 %v161
    %v265 = vunpack.c.l.b16 %v162
    %v266 = vunpack.c.h.b16 %v162
    %v267 = vunpack.c.l.b16 %v163
    %v268 = vunpack.c.h.b16 %v163
    %v269 = vunpack.c.l.b16 %v164
    %v270 = vunpack.c.h.b16 %v164
    %v271 = vunpack.c.l.b16 %v165
    %v272 = vunpack.c.h.b16 %v165
    %v273 = vunpack.c.l.b16 %v166
    %v274 = vunpack.c.h.b16 %v166
    %v275 = vpack.c.b16 %v213, %v211
    %v276 = vpack.c.b16 %v214, %v212
    %v277 = vpack.c.b16 %v217, %v215
    %v278 = vpack.c.b16 %v218, %v216
    %v279 = vpack.c.b16 %v221, %v219
    %v280 = vpack.c.b16 %v222, %v220
    %v281 = vpack.c.b16 %v225, %v223
    %v282 = vpack.c.b16 %v226, %v224
    %v283 = vpack.c.b16 %v229, %v227
    %v284 = vpack.c.b16 %v230, %v228
    %v285 = vpack.c.b16 %v233, %v231
    %v286 = vpack.c.b16 %v234, %v232
    %v287 = vpack.c.b16 %v237, %v235
    %v288 = vpack.c.b16 %v238, %v236
    %v289 = vpack.c.b16 %v241, %v239
    %v290 = vpack.c.b16 %v242, %v240
    %v291 = vpack.c.b16 %v245, %v243
    %v292 = vpack.c.b16 %v246, %v244
    %v293 = vpack.c.b16 %v249, %v247
    %v294 = vpack.c.b16 %v250, %v248
    %v295 = vpack.c.b16 %v253, %v251
    %v296 = vpack.c.b16 %v254, %v252
    %v297 = vpack.c.b16 %v257, %v255
    %v298 = vpack.c.b16 %v258, %v256
    %v299 = vpack.c.b16 %v261, %v259
    %v300 = vpack.c.b16 %v262, %v260
    %v301 = vpack.c.b16 %v265, %v263
    %v302 = vpack.c.b16 %v266, %v264
    %v303 = vpack.c.b16 %v269, %v267
    %v304 = vpack.c.b16 %v270, %v268
    %v305 = vpack.c.b16 %v273, %v271
    %v306 = vpack.c.b16 %v274, %v272
    %339 = vmatprep.subr.bf16.mxu0 %v276
    %340 = vmatpush1.bf16.msra.mxu0 %v275
    %341 = vmatprep.subr.bf16.mxu0 %v278
    %342 = vmatpush1.bf16.msra.mxu0 %v277
    %343 = vmatprep.subr.bf16.mxu0 %v280
    %344 = vmatpush1.bf16.msra.mxu0 %v279
    %345 = vmatprep.subr.bf16.mxu0 %v282
    %346 = vmatpush1.bf16.msra.mxu0 %v281
    %347 = vmatprep.subr.bf16.mxu0 %v284
    %348 = vmatpush1.bf16.msra.mxu0 %v283
    %349 = vmatprep.subr.bf16.mxu0 %v286
    %350 = vmatpush1.bf16.msra.mxu0 %v285
    %351 = vmatprep.subr.bf16.mxu0 %v288
    %352 = vmatpush1.bf16.msra.mxu0 %v287
    %353 = vmatprep.subr.bf16.mxu0 %v290
    %354 = vmatpush1.bf16.msra.mxu0 %v289
    %355 = vmatprep.subr.bf16.mxu0 %v292
    %356 = vmatpush1.bf16.msra.mxu0 %v291
    %357 = vmatprep.subr.bf16.mxu0 %v294
    %358 = vmatpush1.bf16.msra.mxu0 %v293
    %359 = vmatprep.subr.bf16.mxu0 %v296
    %360 = vmatpush1.bf16.msra.mxu0 %v295
    %361 = vmatprep.subr.bf16.mxu0 %v298
    %362 = vmatpush1.bf16.msra.mxu0 %v297
    %363 = vmatprep.subr.bf16.mxu0 %v300
    %364 = vmatpush1.bf16.msra.mxu0 %v299
    %365 = vmatprep.subr.bf16.mxu0 %v302
    %366 = vmatpush1.bf16.msra.mxu0 %v301
    %367 = vmatprep.subr.bf16.mxu0 %v304
    %368 = vmatpush1.bf16.msra.mxu0 %v303
    %369 = vmatprep.subr.bf16.mxu0 %v306
    %370 = vmatpush1.bf16.msra.mxu0 %v305
    %371 = vmatprep.mubr.bf16.mxu0 %v134
    %372 = vmatmul.mubr.bf16.gmra.mrb[0].mxu0 %v133
    %v373 = vpop.f32.mrb[0].mxu0
    %v374 = vadd.f32 %v172, %v373
    %v375 = vpop.f32.mrb[0].mxu0
    %v376 = vadd.f32 %v176, %v375
    %v377 = vpop.f32.mrb[0].mxu0
    %v378 = vpop.f32.mrb[0].mxu0
    %379 = vdwg.mxu0
    %v380 = vmax.f32 %v374, 0.0
    %v381 = vmax.f32 %v376, 0.0
    %v382 = vpack.c.bf16 %v380, %v380
    %v383 = vpack.c.bf16 %v381, %v381
    %v384 = vld [vmem:[#allocation4] sm:$0xf]
    %v385 = vld [vmem:[#allocation4 + $0x4] sm:$0xf]
    %v386 = vld [vmem:[#allocation4 + $0x8] sm:$0xf]
    %v387 = vld [vmem:[#allocation4 + $0xc] sm:$0xf]
    %v388 = vld [vmem:[#allocation4 + $0x10] sm:$0xf]
    %v389 = vld [vmem:[#allocation4 + $0x14] sm:$0xf]
    %v390 = vld [vmem:[#allocation4 + $0x18] sm:$0xf]
    %v391 = vld [vmem:[#allocation4 + $0x1c] sm:$0xf]
    %v392 = vld [vmem:[#allocation4 + $0x20] sm:$0xf]
    %v393 = vld [vmem:[#allocation4 + $0x24] sm:$0xf]
    %v394 = vld [vmem:[#allocation4 + $0x28] sm:$0xf]
    %v395 = vld [vmem:[#allocation4 + $0x2c] sm:$0xf]
    %v396 = vld [vmem:[#allocation4 + $0x30] sm:$0xf]
    %v397 = vld [vmem:[#allocation4 + $0x34] sm:$0xf]
    %v398 = vld [vmem:[#allocation4 + $0x38] sm:$0xf]
    %v399 = vld [vmem:[#allocation4 + $0x3c] sm:$0xf]
    %v400 = vld [vmem:[#allocation4 + $0x40] sm:$0xf]
    %v401 = vld [vmem:[#allocation4 + $0x44] sm:$0xf]
    %v402 = vld [vmem:[#allocation4 + $0x48] sm:$0xf]
    %v403 = vld [vmem:[#allocation4 + $0x4c] sm:$0xf]
    %v404 = vld [vmem:[#allocation4 + $0x50] sm:$0xf]
    %v405 = vld [vmem:[#allocation4 + $0x54] sm:$0xf]
    %v406 = vld [vmem:[#allocation4 + $0x58] sm:$0xf]
    %v407 = vld [vmem:[#allocation4 + $0x5c] sm:$0xf]
    %v408 = vld [vmem:[#allocation4 + $0x60] sm:$0xf]
    %v409 = vld [vmem:[#allocation4 + $0x64] sm:$0xf]
    %v410 = vld [vmem:[#allocation4 + $0x68] sm:$0xf]
    %v411 = vld [vmem:[#allocation4 + $0x6c] sm:$0xf]
    %v412 = vld [vmem:[#allocation4 + $0x70] sm:$0xf]
    %v413 = vld [vmem:[#allocation4 + $0x74] sm:$0xf]
    %v414 = vld [vmem:[#allocation4 + $0x78] sm:$0xf]
    %v415 = vld [vmem:[#allocation4 + $0x7c] sm:$0xf]
    %v416 = vld [vmem:[%s6] sm:$0x1]
    %v418 = vlaneseq
    %v419 = vshrl.u32 %v418, 7
    %v420 = vsub.s32 0, %v419
    %v421 = vrot.slane %v416, %v420
    %v455 = vunpack.c.l.b16 %v384
    %v456 = vunpack.c.l.b16 %v385
    %v457 = vunpack.c.l.b16 %v386
    %v458 = vunpack.c.l.b16 %v387
    %v459 = vunpack.c.l.b16 %v388
    %v460 = vunpack.c.l.b16 %v389
    %v461 = vunpack.c.l.b16 %v390
    %v462 = vunpack.c.l.b16 %v391
    %v463 = vunpack.c.l.b16 %v392
    %v464 = vunpack.c.l.b16 %v393
    %v465 = vunpack.c.l.b16 %v394
    %v466 = vunpack.c.l.b16 %v395
    %v467 = vunpack.c.l.b16 %v396
    %v468 = vunpack.c.l.b16 %v397
    %v469 = vunpack.c.l.b16 %v398
    %v470 = vunpack.c.l.b16 %v399
    %v471 = vunpack.c.l.b16 %v400
    %v472 = vunpack.c.l.b16 %v401
    %v473 = vunpack.c.l.b16 %v402
    %v474 = vunpack.c.l.b16 %v403
    %v475 = vunpack.c.l.b16 %v404
    %v476 = vunpack.c.l.b16 %v405
    %v477 = vunpack.c.l.b16 %v406
    %v478 = vunpack.c.l.b16 %v407
    %v479 = vunpack.c.l.b16 %v408
    %v480 = vunpack.c.l.b16 %v409
    %v481 = vunpack.c.l.b16 %v410
    %v482 = vunpack.c.l.b16 %v411
    %v483 = vunpack.c.l.b16 %v412
    %v484 = vunpack.c.l.b16 %v413
    %v485 = vunpack.c.l.b16 %v414
    %v486 = vunpack.c.l.b16 %v415
    %v487 = vpack.c.b16 %v456, %v455
    %v488 = vpack.c.b16 %v458, %v457
    %v489 = vpack.c.b16 %v460, %v459
    %v490 = vpack.c.b16 %v462, %v461
    %v491 = vpack.c.b16 %v464, %v463
    %v492 = vpack.c.b16 %v466, %v465
    %v493 = vpack.c.b16 %v468, %v467
    %v494 = vpack.c.b16 %v470, %v469
    %v495 = vpack.c.b16 %v472, %v471
    %v496 = vpack.c.b16 %v474, %v473
    %v497 = vpack.c.b16 %v476, %v475
    %v498 = vpack.c.b16 %v478, %v477
    %v499 = vpack.c.b16 %v480, %v479
    %v500 = vpack.c.b16 %v482, %v481
    %v501 = vpack.c.b16 %v484, %v483
    %v502 = vpack.c.b16 %v486, %v485
    %519 = vmatprep.subr.bf16.mxu0 0
    %520 = vmatpush1.bf16.msra.mxu0 %v487
    %521 = vmatprep.subr.bf16.mxu0 0
    %522 = vmatpush1.bf16.msra.mxu0 %v488
    %523 = vmatprep.subr.bf16.mxu0 0
    %524 = vmatpush1.bf16.msra.mxu0 %v489
    %525 = vmatprep.subr.bf16.mxu0 0
    %526 = vmatpush1.bf16.msra.mxu0 %v490
    %527 = vmatprep.subr.bf16.mxu0 0
    %528 = vmatpush1.bf16.msra.mxu0 %v491
    %529 = vmatprep.subr.bf16.mxu0 0
    %530 = vmatpush1.bf16.msra.mxu0 %v492
    %531 = vmatprep.subr.bf16.mxu0 0
    %532 = vmatpush1.bf16.msra.mxu0 %v493
    %533 = vmatprep.subr.bf16.mxu0 0
    %534 = vmatpush1.bf16.msra.mxu0 %v494
    %535 = vmatprep.subr.bf16.mxu0 0
    %536 = vmatpush1.bf16.msra.mxu0 %v495
    %537 = vmatprep.subr.bf16.mxu0 0
    %538 = vmatpush1.bf16.msra.mxu0 %v496
    %539 = vmatprep.subr.bf16.mxu0 0
    %540 = vmatpush1.bf16.msra.mxu0 %v497
    %541 = vmatprep.subr.bf16.mxu0 0
    %542 = vmatpush1.bf16.msra.mxu0 %v498
    %543 = vmatprep.subr.bf16.mxu0 0
    %544 = vmatpush1.bf16.msra.mxu0 %v499
    %545 = vmatprep.subr.bf16.mxu0 0
    %546 = vmatpush1.bf16.msra.mxu0 %v500
    %547 = vmatprep.subr.bf16.mxu0 0
    %548 = vmatpush1.bf16.msra.mxu0 %v501
    %549 = vmatprep.subr.bf16.mxu0 0
    %550 = vmatpush1.bf16.msra.mxu0 %v502
    %551 = vmatprep.mubr.bf16.mxu0 %v383
    %552 = vmatmul.mubr.bf16.gmra.mrb[0].mxu0 %v382
    %v553 = vpop.f32.mrb[0].mxu0
    %v554 = vadd.f32 %v421, %v553
    %v555 = vpop.f32.mrb[0].mxu0
    %v556 = vpop.f32.mrb[0].mxu0
    %v557 = vpop.f32.mrb[0].mxu0
    %558 = vdwg.mxu0
    %559 = vst [vmem:[%s7] sm:$0xff] %v554
    // Predicated region
    $region38: #{net_forward.1} parent=1 // pred_check
      _
    $region39: #{net_forward.1} parent=1 // pred_check_branch
      %561 = sbr.rel (0) target = $region41
    $region40: #{net_forward.1} parent=1 // pred_region
      _
    $region41: #{net_forward.1} parent=1 // pred_fallthru
      _
    // Predicated region
    $region42: #{net_forward.1} parent=1 // pred_check
      _
    $region43: #{net_forward.1} parent=1 // pred_check_branch
      %563 = sbr.rel (0) target = $region45
    $region44: #{net_forward.1} parent=1 // pred_region
      _
    $region45: #{net_forward.1} parent=1 // pred_fallthru
      _
    %564 = vsyncpa [#allocation3], 1
    %565 = vsyncpa [#allocation5], 1

</llo_original>
